<compile_context>
chip_gen: v7x
topology: tpu7x:2x2x1
jax: 0.10.0
libtpu: 0.0.40
codegen_flags: <defaults>
</compile_context>

<pallas_src>
import math

import jax
import jax.numpy as jnp
from jax.experimental import pallas as pl
from jax.experimental.pallas import tpu as pltpu


def _gru_chunk_kernel(x_ref, h0_ref, wih_ref, whh_ref, b1_ref, bhn_ref,
                      out_ref, gx_scr, h_scr):
    """One time-chunk of the GRU.

    Phase 1: bulk input projection for the chunk as one (Tc*B, H) @ (H, 3H)
             MXU matmul (off the serial path); the r/z thirds of b_hh are
             already folded into b1.
    Phase 2: serial recurrence over the chunk; hidden state lives in a VMEM
             scratch that persists across grid steps.
    """
    Tc, B, H = x_ref.shape

    @pl.when(pl.program_id(0) == 0)
    def _():
        h_scr[...] = h0_ref[...].astype(jnp.float32)

    # ---- Phase 1: bulk input projection (one MXU matmul per chunk).
    x_all = x_ref[...].reshape(Tc * B, H)
    gx = (jnp.dot(x_all, wih_ref[...], preferred_element_type=jnp.float32)
          + b1_ref[...])
    gx_scr[...] = gx.reshape(Tc, B, 3 * H)

    # ---- Phase 2: serial recurrence.  Loop invariants hoisted: W_hh stays
    # resident, and the n-gate hidden bias is broadcast once (JAX does not CSE
    # broadcast_in_dim inside loops).
    whh = whh_ref[...]                                      # (H, 3H)
    bhn = jnp.broadcast_to(bhn_ref[...], (B, H))            # (B, H)
    # TODO(synk): for H >= 128, park W_hh in the MXU staging registers once via
    # pltpu.matmul_push_rhs / matmul_acc_lhs / matmul_pop instead of re-pushing
    # the same RHS with jnp.dot every step.

    def step(t, carry):
        h_prev = h_scr[...]                                 # (B, H)
        g = gx_scr[t]                                       # (B, 3H) aligned leading-dim read
        gh = jnp.dot(h_prev, whh, preferred_element_type=jnp.float32)
        rz = jax.nn.sigmoid(g[:, :2 * H] + gh[:, :2 * H])   # fused r/z pre-activation
        r = rz[:, :H]
        z = rz[:, H:]
        # b_hn must stay inside r * (...) to match torch.nn.GRU.
        n = jnp.tanh(g[:, 2 * H:] + r * (gh[:, 2 * H:] + bhn))
        h_new = n + z * (h_prev - n)                        # == (1-z)*n + z*h_prev, 1 fewer VALU op
        h_scr[...] = h_new
        out_ref[t] = h_new.astype(out_ref.dtype)            # aligned leading-dim store
        return carry

    jax.lax.fori_loop(0, Tc, step, 0, unroll=min(int(Tc), 8))


def gru_pallas(x_btH, h0_bH, W_ih_T, W_hh_T, b1, b_hn, *, time_chunk=64):
    """x_btH: (B, T, H) batch_first input.  Returns (B, T, H) GRU outputs."""
    B, T, H = x_btH.shape

    # Pad the batch to a multiple of 8 (f32 sublane tile) so per-step slabs are
    # whole-sublane vregs; pad T to a multiple of the time chunk.
    Bp = ((B + 7) // 8) * 8
    Tc = max(1, min(time_chunk, T))
    Tp = ((T + Tc - 1) // Tc) * Tc

    x = jnp.transpose(x_btH, (1, 0, 2))                     # time-major (T, B, H)
    x = jnp.pad(x, ((0, Tp - T), (0, Bp - B), (0, 0)))
    h0 = jnp.pad(h0_bH, ((0, Bp - B), (0, 0)))

    out_tbH = pl.pallas_call(
        _gru_chunk_kernel,
        out_shape=jax.ShapeDtypeStruct((Tp, Bp, H), x_btH.dtype),
        grid_spec=pltpu.PrefetchScalarGridSpec(
            num_scalar_prefetch=0,
            grid=(Tp // Tc,),
            in_specs=[
                pl.BlockSpec((Tc, Bp, H), lambda t: (t, 0, 0)),    # x chunk (time-major)
                pl.BlockSpec((Bp, H), lambda t: (0, 0)),           # h0
                pl.BlockSpec((H, 3 * H), lambda t: (0, 0)),        # W_ih^T
                pl.BlockSpec((H, 3 * H), lambda t: (0, 0)),        # W_hh^T
                pl.BlockSpec((1, 3 * H), lambda t: (0, 0)),        # b_ih + [b_hh_r|b_hh_z|0]
                pl.BlockSpec((1, H), lambda t: (0, 0)),            # b_hh n-gate third
            ],
            out_specs=pl.BlockSpec((Tc, Bp, H), lambda t: (t, 0, 0)),
            scratch_shapes=[
                pltpu.VMEM((Tc, Bp, 3 * H), jnp.float32),          # gx for one chunk
                pltpu.VMEM((Bp, H), jnp.float32),                  # h carry across chunks
            ],
        ),
        compiler_params=pltpu.CompilerParams(
            # Hidden state carries across the time-chunk axis -> "arbitrary".
            dimension_semantics=("arbitrary",),
        ),
    )(x, h0, W_ih_T, W_hh_T, b1, b_hn)

    return jnp.transpose(out_tbH[:T, :B], (1, 0, 2))


class GRULayerPallas:
    """Mirror of the PyTorch GRULayer: one shared single-layer nn.GRU
    (batch_first=True) applied to (out_p, out_h), with learnable all-zero
    initial hidden states h_0p / h_0h."""

    def __init__(self, hidden_size, key, dropout=0.0, time_chunk=64):
        H = hidden_size
        k = 1.0 / math.sqrt(H)                              # PyTorch GRU init range
        k1, k2, k3, k4 = jax.random.split(key, 4)
        self.W_ih = jax.random.uniform(k1, (3 * H, H), jnp.float32, -k, k)
        self.W_hh = jax.random.uniform(k2, (3 * H, H), jnp.float32, -k, k)
        self.b_ih = jax.random.uniform(k3, (3 * H,), jnp.float32, -k, k)
        self.b_hh = jax.random.uniform(k4, (3 * H,), jnp.float32, -k, k)
        # Kernel-friendly forms precomputed once (no per-call transposes).
        # Only the r/z thirds of b_hh may be folded into the bulk bias; the
        # n-gate third must stay inside r * (W_hn h + b_hn) in the recurrence.
        self.W_ih_T = jnp.transpose(self.W_ih)              # (H, 3H)
        self.W_hh_T = jnp.transpose(self.W_hh)              # (H, 3H)
        self.b1 = jnp.concatenate(
            [self.b_ih[:2 * H] + self.b_hh[:2 * H], self.b_ih[2 * H:]]
        ).reshape(1, 3 * H)
        self.b_hn = self.b_hh[2 * H:].reshape(1, H)
        self.h_0h = jnp.zeros((1, 1, H), jnp.float32)
        self.h_0p = jnp.zeros((1, 1, H), jnp.float32)
        self.hidden_size = H
        self.time_chunk = time_chunk
        # NOTE: nn.GRU dropout is a no-op with num_layers=1 (PyTorch warns), so
        # it is intentionally not modeled.
        # NOTE: kernel assumes input_size == hidden_size, as in the module spec.

    def __call__(self, out_p, out_h):
        H = self.hidden_size
        Bp, Tp = out_p.shape[0], out_p.shape[1]
        Bh, Th = out_h.shape[0], out_h.shape[1]
        T = max(Tp, Th)
        # Shared weights + independent sequences: fuse both streams into ONE
        # launch along the batch axis.  If lengths differ, pad the shorter one
        # in time; padded trailing steps never feed back into real outputs and
        # are sliced away.
        xp = out_p if Tp == T else jnp.pad(out_p, ((0, 0), (0, T - Tp), (0, 0)))
        xh = out_h if Th == T else jnp.pad(out_h, ((0, 0), (0, T - Th), (0, 0)))
        x = jnp.concatenate([xp, xh], axis=0)
        h0 = jnp.concatenate(
            [jnp.broadcast_to(self.h_0p[0], (Bp, H)),
             jnp.broadcast_to(self.h_0h[0], (Bh, H))], axis=0)
        y = gru_pallas(x, h0, self.W_ih_T, self.W_hh_T, self.b1, self.b_hn,
                       time_chunk=self.time_chunk)
        return (y[:Bp, :Tp], y[Bp:, :Th])


def _gru_ref(x, h0, W_ih, W_hh, b_ih, b_hh):
    """Pure-JAX reference matching torch.nn.GRU (batch_first)."""
    H = x.shape[-1]

    def step(h, x_t):
        gx = x_t @ W_ih.T + b_ih
        gh = h @ W_hh.T + b_hh
        r = jax.nn.sigmoid(gx[:, :H] + gh[:, :H])
        z = jax.nn.sigmoid(gx[:, H:2 * H] + gh[:, H:2 * H])
        n = jnp.tanh(gx[:, 2 * H:] + r * gh[:, 2 * H:])
        h_new = (1.0 - z) * n + z * h
        return h_new, h_new

    _, ys = jax.lax.scan(step, h0, jnp.transpose(x, (1, 0, 2)))
    return jnp.transpose(ys, (1, 0, 2))


if __name__ == "__main__":
    B, T, H = 2, 8, 32
    key = jax.random.PRNGKey(0)
    k_params, k_p, k_h = jax.random.split(key, 3)

    # time_chunk=4 -> two grid steps at T=8, exercising the cross-chunk h carry.
    layer = GRULayerPallas(hidden_size=H, key=k_params, time_chunk=4)

    out_p = jax.random.normal(k_p, (B, T, H), jnp.float32)
    out_h = jax.random.normal(k_h, (B, T, H), jnp.float32)

    yp, yh = layer(out_p, out_h)
    yp = jax.block_until_ready(yp)
    yh = jax.block_until_ready(yh)

    # Sanity check against a pure-JAX reference of torch.nn.GRU semantics.
    h0 = jnp.zeros((B, H), jnp.float32)
    yp_ref = _gru_ref(out_p, h0, layer.W_ih, layer.W_hh, layer.b_ih, layer.b_hh)
    yh_ref = _gru_ref(out_h, h0, layer.W_ih, layer.W_hh, layer.b_ih, layer.b_hh)
    assert yp.shape == (B, T, H) and yh.shape == (B, T, H)
    assert jnp.allclose(yp, yp_ref, atol=1e-5, rtol=1e-5)
    assert jnp.allclose(yh, yh_ref, atol=1e-5, rtol=1e-5)

    print("KERNEL_OK")
</pallas_src>

<mosaic_0001>
module attributes {stable_mosaic.version = 11 : i64} {
  func.func @_gru_chunk_kernel(%arg0: i32, %arg1: memref<4x8x32xf32, #tpu.memory_space<vmem>>, %arg2: memref<8x32xf32, #tpu.memory_space<vmem>>, %arg3: memref<32x96xf32, #tpu.memory_space<vmem>>, %arg4: memref<32x96xf32, #tpu.memory_space<vmem>>, %arg5: memref<1x96xf32, #tpu.memory_space<vmem>>, %arg6: memref<1x32xf32, #tpu.memory_space<vmem>>, %arg7: memref<4x8x32xf32, #tpu.memory_space<vmem>>, %arg8: memref<4x8x96xf32, #tpu.memory_space<vmem>>, %arg9: memref<8x32xf32, #tpu.memory_space<vmem>>) attributes {dimension_semantics = [#tpu.dimension_semantics<arbitrary>], iteration_bounds = array<i64: 2>, scalar_prefetch = 0 : i64, scratch_operands = 2 : i64, tpu.core_type = #tpu.core_type<tc>, window_params = [{transform_indices = @transform_0, window_bounds = array<i64: 4, 8, 32>}, {pipeline_mode = #tpu.pipeline_mode<synchronous>, transform_indices = @transform_1, window_bounds = array<i64: 8, 32>}, {pipeline_mode = #tpu.pipeline_mode<synchronous>, transform_indices = @transform_2, window_bounds = array<i64: 32, 96>}, {pipeline_mode = #tpu.pipeline_mode<synchronous>, transform_indices = @transform_3, window_bounds = array<i64: 32, 96>}, {pipeline_mode = #tpu.pipeline_mode<synchronous>, transform_indices = @transform_4, window_bounds = array<i64: 1, 96>}, {pipeline_mode = #tpu.pipeline_mode<synchronous>, transform_indices = @transform_5, window_bounds = array<i64: 1, 32>}, {transform_indices = @transform_6, window_bounds = array<i64: 4, 8, 32>}]} {
    %c0_i32 = arith.constant 0 : i32
    %0 = arith.cmpi eq, %arg0, %c0_i32 : i32
    %1 = arith.extui %0 : i1 to i32
    %c0_i32_0 = arith.constant 0 : i32
    %2 = arith.cmpi ne, %1, %c0_i32_0 : i32
    scf.if %2 {
      %c0_55 = arith.constant 0 : index
      %c0_56 = arith.constant 0 : index
      %132 = vector.load %arg2[%c0_55, %c0_56] : memref<8x32xf32, #tpu.memory_space<vmem>>, vector<8x32xf32>
      %c0_57 = arith.constant 0 : index
      %c0_58 = arith.constant 0 : index
      %133 = vector.load %arg9[%c0_57, %c0_58] : memref<8x32xf32, #tpu.memory_space<vmem>>, vector<8x32xf32>
      tpu.vector_store %arg9[%c0_57, %c0_58], %132 {strides = array<i32>} : memref<8x32xf32, #tpu.memory_space<vmem>>, vector<8x32xf32>,
    } else {
    }
    %c0 = arith.constant 0 : index
    %c0_1 = arith.constant 0 : index
    %c0_2 = arith.constant 0 : index
    %3 = vector.load %arg1[%c0, %c0_1, %c0_2] : memref<4x8x32xf32, #tpu.memory_space<vmem>>, vector<4x8x32xf32>
    %4 = vector.shape_cast %3 : vector<4x8x32xf32> to vector<32x32xf32>
    %c0_3 = arith.constant 0 : index
    %c0_4 = arith.constant 0 : index
    %5 = vector.load %arg3[%c0_3, %c0_4] : memref<32x96xf32, #tpu.memory_space<vmem>>, vector<32x96xf32>
    %cst = arith.constant dense<0.000000e+00> : vector<32x96xf32>
    %6 = tpu.matmul %4, %5, %cst {dimension_numbers = #tpu.dot_dimension_numbers<[1], [0], [0], [1], [0, 0, 1, 1], [], []>} : vector<32x32xf32>, vector<32x96xf32>, vector<32x96xf32> -> vector<32x96xf32>
    %c0_5 = arith.constant 0 : index
    %c0_6 = arith.constant 0 : index
    %7 = vector.load %arg5[%c0_5, %c0_6] : memref<1x96xf32, #tpu.memory_space<vmem>>, vector<1x96xf32>
    %8 = vector.broadcast %7 : vector<1x96xf32> to vector<32x96xf32>
    %9 = arith.addf %6, %8 : vector<32x96xf32>
    %10 = vector.shape_cast %9 : vector<32x96xf32> to vector<4x8x96xf32>
    %c0_7 = arith.constant 0 : index
    %c0_8 = arith.constant 0 : index
    %c0_9 = arith.constant 0 : index
    %11 = vector.load %arg8[%c0_7, %c0_8, %c0_9] : memref<4x8x96xf32, #tpu.memory_space<vmem>>, vector<4x8x96xf32>
    tpu.vector_store %arg8[%c0_7, %c0_8, %c0_9], %10 {strides = array<i32>} : memref<4x8x96xf32, #tpu.memory_space<vmem>>, vector<4x8x96xf32>,
    %c0_10 = arith.constant 0 : index
    %c0_11 = arith.constant 0 : index
    %12 = vector.load %arg4[%c0_10, %c0_11] : memref<32x96xf32, #tpu.memory_space<vmem>>, vector<32x96xf32>
    %c0_12 = arith.constant 0 : index
    %c0_13 = arith.constant 0 : index
    %13 = vector.load %arg6[%c0_12, %c0_13] : memref<1x32xf32, #tpu.memory_space<vmem>>, vector<1x32xf32>
    %14 = vector.shape_cast %13 : vector<1x32xf32> to vector<1x32xf32>
    %15 = vector.broadcast %14 : vector<1x32xf32> to vector<8x32xf32>
    %c0_i32_14 = arith.constant 0 : i32
    %c0_15 = arith.constant 0 : index
    %c0_16 = arith.constant 0 : index
    %16 = vector.load %arg9[%c0_15, %c0_16] : memref<8x32xf32, #tpu.memory_space<vmem>>, vector<8x32xf32>
    %17 = arith.index_cast %c0_i32_14 : i32 to index
    %c0_17 = arith.constant 0 : index
    %c0_18 = arith.constant 0 : index
    %18 = vector.load %arg8[%17, %c0_17, %c0_18] : memref<4x8x96xf32, #tpu.memory_space<vmem>>, vector<1x8x96xf32>
    %19 = vector.shape_cast %18 : vector<1x8x96xf32> to vector<8x96xf32>
    %cst_19 = arith.constant dense<0.000000e+00> : vector<8x96xf32>
    %20 = tpu.matmul %16, %12, %cst_19 {dimension_numbers = #tpu.dot_dimension_numbers<[1], [0], [0], [1], [0, 0, 1, 1], [], []>} : vector<8x32xf32>, vector<32x96xf32>, vector<8x96xf32> -> vector<8x96xf32>
    %21 = vector.extract_strided_slice %19 {offsets = [0, 0], sizes = [8, 64], strides = [1, 1]} : vector<8x96xf32> to vector<8x64xf32>
    %22 = vector.extract_strided_slice %20 {offsets = [0, 0], sizes = [8, 64], strides = [1, 1]} : vector<8x96xf32> to vector<8x64xf32>
    %23 = arith.addf %21, %22 : vector<8x64xf32>
    %24 = arith.negf %23 : vector<8x64xf32>
    %25 = math.exp %24 : vector<8x64xf32>
    %cst_20 = arith.constant 1.000000e+00 : f32
    %26 = vector.broadcast %cst_20 : f32 to vector<8x64xf32>
    %27 = arith.addf %26, %25 : vector<8x64xf32>
    %28 = arith.divf %26, %27 : vector<8x64xf32>
    %29 = vector.extract_strided_slice %28 {offsets = [0, 0], sizes = [8, 32], strides = [1, 1]} : vector<8x64xf32> to vector<8x32xf32>
    %30 = vector.extract_strided_slice %28 {offsets = [0, 32], sizes = [8, 32], strides = [1, 1]} : vector<8x64xf32> to vector<8x32xf32>
    %31 = vector.extract_strided_slice %19 {offsets = [0, 64], sizes = [8, 32], strides = [1, 1]} : vector<8x96xf32> to vector<8x32xf32>
    %32 = vector.extract_strided_slice %20 {offsets = [0, 64], sizes = [8, 32], strides = [1, 1]} : vector<8x96xf32> to vector<8x32xf32>
    %33 = arith.addf %32, %15 : vector<8x32xf32>
    %34 = arith.mulf %29, %33 : vector<8x32xf32>
    %35 = arith.addf %31, %34 : vector<8x32xf32>
    %36 = math.tanh %35 : vector<8x32xf32>
    %37 = arith.subf %16, %36 : vector<8x32xf32>
    %38 = arith.mulf %30, %37 : vector<8x32xf32>
    %39 = arith.addf %36, %38 : vector<8x32xf32>
    %c0_21 = arith.constant 0 : index
    %c0_22 = arith.constant 0 : index
    %40 = vector.load %arg9[%c0_21, %c0_22] : memref<8x32xf32, #tpu.memory_space<vmem>>, vector<8x32xf32>
    tpu.vector_store %arg9[%c0_21, %c0_22], %39 {strides = array<i32>} : memref<8x32xf32, #tpu.memory_space<vmem>>, vector<8x32xf32>,
    %41 = arith.index_cast %c0_i32_14 : i32 to index
    %c0_23 = arith.constant 0 : index
    %c0_24 = arith.constant 0 : index
    %42 = vector.load %arg7[%41, %c0_23, %c0_24] : memref<4x8x32xf32, #tpu.memory_space<vmem>>, vector<1x8x32xf32>
    %43 = vector.shape_cast %42 : vector<1x8x32xf32> to vector<8x32xf32>
    %44 = vector.shape_cast %39 : vector<8x32xf32> to vector<1x8x32xf32>
    tpu.vector_store %arg7[%41, %c0_23, %c0_24], %44 {strides = array<i32>} : memref<4x8x32xf32, #tpu.memory_space<vmem>>, vector<1x8x32xf32>,
    %c1_i32 = arith.constant 1 : i32
    %c0_25 = arith.constant 0 : index
    %c0_26 = arith.constant 0 : index
    %45 = vector.load %arg9[%c0_25, %c0_26] : memref<8x32xf32, #tpu.memory_space<vmem>>, vector<8x32xf32>
    %46 = arith.index_cast %c1_i32 : i32 to index
    %c0_27 = arith.constant 0 : index
    %c0_28 = arith.constant 0 : index
    %47 = vector.load %arg8[%46, %c0_27, %c0_28] : memref<4x8x96xf32, #tpu.memory_space<vmem>>, vector<1x8x96xf32>
    %48 = vector.shape_cast %47 : vector<1x8x96xf32> to vector<8x96xf32>
    %cst_29 = arith.constant dense<0.000000e+00> : vector<8x96xf32>
    %49 = tpu.matmul %45, %12, %cst_29 {dimension_numbers = #tpu.dot_dimension_numbers<[1], [0], [0], [1], [0, 0, 1, 1], [], []>} : vector<8x32xf32>, vector<32x96xf32>, vector<8x96xf32> -> vector<8x96xf32>
    %50 = vector.extract_strided_slice %48 {offsets = [0, 0], sizes = [8, 64], strides = [1, 1]} : vector<8x96xf32> to vector<8x64xf32>
    %51 = vector.extract_strided_slice %49 {offsets = [0, 0], sizes = [8, 64], strides = [1, 1]} : vector<8x96xf32> to vector<8x64xf32>
    %52 = arith.addf %50, %51 : vector<8x64xf32>
    %53 = arith.negf %52 : vector<8x64xf32>
    %54 = math.exp %53 : vector<8x64xf32>
    %cst_30 = arith.constant 1.000000e+00 : f32
    %55 = vector.broadcast %cst_30 : f32 to vector<8x64xf32>
    %56 = arith.addf %55, %54 : vector<8x64xf32>
    %57 = arith.divf %55, %56 : vector<8x64xf32>
    %58 = vector.extract_strided_slice %57 {offsets = [0, 0], sizes = [8, 32], strides = [1, 1]} : vector<8x64xf32> to vector<8x32xf32>
    %59 = vector.extract_strided_slice %57 {offsets = [0, 32], sizes = [8, 32], strides = [1, 1]} : vector<8x64xf32> to vector<8x32xf32>
    %60 = vector.extract_strided_slice %48 {offsets = [0, 64], sizes = [8, 32], strides = [1, 1]} : vector<8x96xf32> to vector<8x32xf32>
    %61 = vector.extract_strided_slice %49 {offsets = [0, 64], sizes = [8, 32], strides = [1, 1]} : vector<8x96xf32> to vector<8x32xf32>
    %62 = arith.addf %61, %15 : vector<8x32xf32>
    %63 = arith.mulf %58, %62 : vector<8x32xf32>
    %64 = arith.addf %60, %63 : vector<8x32xf32>
    %65 = math.tanh %64 : vector<8x32xf32>
    %66 = arith.subf %45, %65 : vector<8x32xf32>
    %67 = arith.mulf %59, %66 : vector<8x32xf32>
    %68 = arith.addf %65, %67 : vector<8x32xf32>
    %c0_31 = arith.constant 0 : index
    %c0_32 = arith.constant 0 : index
    %69 = vector.load %arg9[%c0_31, %c0_32] : memref<8x32xf32, #tpu.memory_space<vmem>>, vector<8x32xf32>
    tpu.vector_store %arg9[%c0_31, %c0_32], %68 {strides = array<i32>} : memref<8x32xf32, #tpu.memory_space<vmem>>, vector<8x32xf32>,
    %70 = arith.index_cast %c1_i32 : i32 to index
    %c0_33 = arith.constant 0 : index
    %c0_34 = arith.constant 0 : index
    %71 = vector.load %arg7[%70, %c0_33, %c0_34] : memref<4x8x32xf32, #tpu.memory_space<vmem>>, vector<1x8x32xf32>
    %72 = vector.shape_cast %71 : vector<1x8x32xf32> to vector<8x32xf32>
    %73 = vector.shape_cast %68 : vector<8x32xf32> to vector<1x8x32xf32>
    tpu.vector_store %arg7[%70, %c0_33, %c0_34], %73 {strides = array<i32>} : memref<4x8x32xf32, #tpu.memory_space<vmem>>, vector<1x8x32xf32>,
    %c2_i32 = arith.constant 2 : i32
    %c0_35 = arith.constant 0 : index
    %c0_36 = arith.constant 0 : index
    %74 = vector.load %arg9[%c0_35, %c0_36] : memref<8x32xf32, #tpu.memory_space<vmem>>, vector<8x32xf32>
    %75 = arith.index_cast %c2_i32 : i32 to index
    %c0_37 = arith.constant 0 : index
    %c0_38 = arith.constant 0 : index
    %76 = vector.load %arg8[%75, %c0_37, %c0_38] : memref<4x8x96xf32, #tpu.memory_space<vmem>>, vector<1x8x96xf32>
    %77 = vector.shape_cast %76 : vector<1x8x96xf32> to vector<8x96xf32>
    %cst_39 = arith.constant dense<0.000000e+00> : vector<8x96xf32>
    %78 = tpu.matmul %74, %12, %cst_39 {dimension_numbers = #tpu.dot_dimension_numbers<[1], [0], [0], [1], [0, 0, 1, 1], [], []>} : vector<8x32xf32>, vector<32x96xf32>, vector<8x96xf32> -> vector<8x96xf32>
    %79 = vector.extract_strided_slice %77 {offsets = [0, 0], sizes = [8, 64], strides = [1, 1]} : vector<8x96xf32> to vector<8x64xf32>
    %80 = vector.extract_strided_slice %78 {offsets = [0, 0], sizes = [8, 64], strides = [1, 1]} : vector<8x96xf32> to vector<8x64xf32>
    %81 = arith.addf %79, %80 : vector<8x64xf32>
    %82 = arith.negf %81 : vector<8x64xf32>
    %83 = math.exp %82 : vector<8x64xf32>
    %cst_40 = arith.constant 1.000000e+00 : f32
    %84 = vector.broadcast %cst_40 : f32 to vector<8x64xf32>
    %85 = arith.addf %84, %83 : vector<8x64xf32>
    %86 = arith.divf %84, %85 : vector<8x64xf32>
    %87 = vector.extract_strided_slice %86 {offsets = [0, 0], sizes = [8, 32], strides = [1, 1]} : vector<8x64xf32> to vector<8x32xf32>
    %88 = vector.extract_strided_slice %86 {offsets = [0, 32], sizes = [8, 32], strides = [1, 1]} : vector<8x64xf32> to vector<8x32xf32>
    %89 = vector.extract_strided_slice %77 {offsets = [0, 64], sizes = [8, 32], strides = [1, 1]} : vector<8x96xf32> to vector<8x32xf32>
    %90 = vector.extract_strided_slice %78 {offsets = [0, 64], sizes = [8, 32], strides = [1, 1]} : vector<8x96xf32> to vector<8x32xf32>
    %91 = arith.addf %90, %15 : vector<8x32xf32>
    %92 = arith.mulf %87, %91 : vector<8x32xf32>
    %93 = arith.addf %89, %92 : vector<8x32xf32>
    %94 = math.tanh %93 : vector<8x32xf32>
    %95 = arith.subf %74, %94 : vector<8x32xf32>
    %96 = arith.mulf %88, %95 : vector<8x32xf32>
    %97 = arith.addf %94, %96 : vector<8x32xf32>
    %c0_41 = arith.constant 0 : index
    %c0_42 = arith.constant 0 : index
    %98 = vector.load %arg9[%c0_41, %c0_42] : memref<8x32xf32, #tpu.memory_space<vmem>>, vector<8x32xf32>
    tpu.vector_store %arg9[%c0_41, %c0_42], %97 {strides = array<i32>} : memref<8x32xf32, #tpu.memory_space<vmem>>, vector<8x32xf32>,
    %99 = arith.index_cast %c2_i32 : i32 to index
    %c0_43 = arith.constant 0 : index
    %c0_44 = arith.constant 0 : index
    %100 = vector.load %arg7[%99, %c0_43, %c0_44] : memref<4x8x32xf32, #tpu.memory_space<vmem>>, vector<1x8x32xf32>
    %101 = vector.shape_cast %100 : vector<1x8x32xf32> to vector<8x32xf32>
    %102 = vector.shape_cast %97 : vector<8x32xf32> to vector<1x8x32xf32>
    tpu.vector_store %arg7[%99, %c0_43, %c0_44], %102 {strides = array<i32>} : memref<4x8x32xf32, #tpu.memory_space<vmem>>, vector<1x8x32xf32>,
    %c3_i32 = arith.constant 3 : i32
    %c0_45 = arith.constant 0 : index
    %c0_46 = arith.constant 0 : index
    %103 = vector.load %arg9[%c0_45, %c0_46] : memref<8x32xf32, #tpu.memory_space<vmem>>, vector<8x32xf32>
    %104 = arith.index_cast %c3_i32 : i32 to index
    %c0_47 = arith.constant 0 : index
    %c0_48 = arith.constant 0 : index
    %105 = vector.load %arg8[%104, %c0_47, %c0_48] : memref<4x8x96xf32, #tpu.memory_space<vmem>>, vector<1x8x96xf32>
    %106 = vector.shape_cast %105 : vector<1x8x96xf32> to vector<8x96xf32>
    %cst_49 = arith.constant dense<0.000000e+00> : vector<8x96xf32>
    %107 = tpu.matmul %103, %12, %cst_49 {dimension_numbers = #tpu.dot_dimension_numbers<[1], [0], [0], [1], [0, 0, 1, 1], [], []>} : vector<8x32xf32>, vector<32x96xf32>, vector<8x96xf32> -> vector<8x96xf32>
    %108 = vector.extract_strided_slice %106 {offsets = [0, 0], sizes = [8, 64], strides = [1, 1]} : vector<8x96xf32> to vector<8x64xf32>
    %109 = vector.extract_strided_slice %107 {offsets = [0, 0], sizes = [8, 64], strides = [1, 1]} : vector<8x96xf32> to vector<8x64xf32>
    %110 = arith.addf %108, %109 : vector<8x64xf32>
    %111 = arith.negf %110 : vector<8x64xf32>
    %112 = math.exp %111 : vector<8x64xf32>
    %cst_50 = arith.constant 1.000000e+00 : f32
    %113 = vector.broadcast %cst_50 : f32 to vector<8x64xf32>
    %114 = arith.addf %113, %112 : vector<8x64xf32>
    %115 = arith.divf %113, %114 : vector<8x64xf32>
    %116 = vector.extract_strided_slice %115 {offsets = [0, 0], sizes = [8, 32], strides = [1, 1]} : vector<8x64xf32> to vector<8x32xf32>
    %117 = vector.extract_strided_slice %115 {offsets = [0, 32], sizes = [8, 32], strides = [1, 1]} : vector<8x64xf32> to vector<8x32xf32>
    %118 = vector.extract_strided_slice %106 {offsets = [0, 64], sizes = [8, 32], strides = [1, 1]} : vector<8x96xf32> to vector<8x32xf32>
    %119 = vector.extract_strided_slice %107 {offsets = [0, 64], sizes = [8, 32], strides = [1, 1]} : vector<8x96xf32> to vector<8x32xf32>
    %120 = arith.addf %119, %15 : vector<8x32xf32>
    %121 = arith.mulf %116, %120 : vector<8x32xf32>
    %122 = arith.addf %118, %121 : vector<8x32xf32>
    %123 = math.tanh %122 : vector<8x32xf32>
    %124 = arith.subf %103, %123 : vector<8x32xf32>
    %125 = arith.mulf %117, %124 : vector<8x32xf32>
    %126 = arith.addf %123, %125 : vector<8x32xf32>
    %c0_51 = arith.constant 0 : index
    %c0_52 = arith.constant 0 : index
    %127 = vector.load %arg9[%c0_51, %c0_52] : memref<8x32xf32, #tpu.memory_space<vmem>>, vector<8x32xf32>
    tpu.vector_store %arg9[%c0_51, %c0_52], %126 {strides = array<i32>} : memref<8x32xf32, #tpu.memory_space<vmem>>, vector<8x32xf32>,
    %128 = arith.index_cast %c3_i32 : i32 to index
    %c0_53 = arith.constant 0 : index
    %c0_54 = arith.constant 0 : index
    %129 = vector.load %arg7[%128, %c0_53, %c0_54] : memref<4x8x32xf32, #tpu.memory_space<vmem>>, vector<1x8x32xf32>
    %130 = vector.shape_cast %129 : vector<1x8x32xf32> to vector<8x32xf32>
    %131 = vector.shape_cast %126 : vector<8x32xf32> to vector<1x8x32xf32>
    tpu.vector_store %arg7[%128, %c0_53, %c0_54], %131 {strides = array<i32>} : memref<4x8x32xf32, #tpu.memory_space<vmem>>, vector<1x8x32xf32>,
    %c4_i32 = arith.constant 4 : i32
    return
  }
  func.func @transform_0(%arg0: i32) -> (i32, i32, i32) {
    %c0_i32 = arith.constant 0 : i32
    %c0_i32_0 = arith.constant 0 : i32
    %c0_i32_1 = arith.constant 0 : i32
    return %arg0, %c0_i32, %c0_i32_0 : i32, i32, i32
  }
  func.func @transform_1(%arg0: i32) -> (i32, i32) {
    %c0_i32 = arith.constant 0 : i32
    %c0_i32_0 = arith.constant 0 : i32
    %c0_i32_1 = arith.constant 0 : i32
    return %c0_i32, %c0_i32_0 : i32, i32
  }
  func.func @transform_2(%arg0: i32) -> (i32, i32) {
    %c0_i32 = arith.constant 0 : i32
    %c0_i32_0 = arith.constant 0 : i32
    %c0_i32_1 = arith.constant 0 : i32
    return %c0_i32, %c0_i32_0 : i32, i32
  }
  func.func @transform_3(%arg0: i32) -> (i32, i32) {
    %c0_i32 = arith.constant 0 : i32
    %c0_i32_0 = arith.constant 0 : i32
    %c0_i32_1 = arith.constant 0 : i32
    return %c0_i32, %c0_i32_0 : i32, i32
  }
  func.func @transform_4(%arg0: i32) -> (i32, i32) {
    %c0_i32 = arith.constant 0 : i32
    %c0_i32_0 = arith.constant 0 : i32
    %c0_i32_1 = arith.constant 0 : i32
    return %c0_i32, %c0_i32_0 : i32, i32
  }
  func.func @transform_5(%arg0: i32) -> (i32, i32) {
    %c0_i32 = arith.constant 0 : i32
    %c0_i32_0 = arith.constant 0 : i32
    %c0_i32_1 = arith.constant 0 : i32
    return %c0_i32, %c0_i32_0 : i32, i32
  }
  func.func @transform_6(%arg0: i32) -> (i32, i32, i32) {
    %c0_i32 = arith.constant 0 : i32
    %c0_i32_0 = arith.constant 0 : i32
    %c0_i32_1 = arith.constant 0 : i32
    return %arg0, %c0_i32, %c0_i32_0 : i32, i32, i32
  }
}

</mosaic_0001>

<llo_original>
// kernel: tpu_custom_call.1
$region0: #{tpu_custom_call.1}
  #allocation0 [shape = 'u32[]', space=smem, size = 0x4, offset = 0x4, fixed_abs, tag = 'smem constant byte address 0x4 - core index']
  #allocation1 [shape = 'u32[144,128]{1,0:T(1,128)}', space=vmem, size = 0x12000, scoped, tag = 'internal scratch']
  #allocation2 [shape = 'f32[4,8,96]{2,1,0:T(8,128)}', space=vmem, size = 0x4000, scoped, tag = 'scratch operand']
  #allocation3 [shape = 'f32[8,32]{1,0:T(8,128)}', space=vmem, size = 0x1000, scoped, tag = 'scratch operand']
  %s0 = inlined_call_operand.hbm [shape: f32[8,8,32], index: 0, kind: input, shape index: {}]
  %s1 = inlined_call_operand.hbm [shape: f32[8,32], index: 1, kind: input, shape index: {}]
  %s2 = inlined_call_operand.hbm [shape: f32[32,96], index: 2, kind: input, shape index: {}]
  %s3 = inlined_call_operand.hbm [shape: f32[32,96], index: 3, kind: input, shape index: {}]
  %s4 = inlined_call_operand.vmem [shape: f32[1,96], index: 4, kind: input, shape index: {}]
  %s5 = inlined_call_operand.vmem [shape: f32[1,32], index: 5, kind: input, shape index: {}]
  %s6 = inlined_call_operand.hbm [shape: f32[8,8,32], index: 6, kind: output, shape index: {}]
  %s7 = sld [smem:[#allocation0]]
  $region77: #{tpu_custom_call.1} parent=0
    _
  %s9 = ssub.s32 1, %s7
  %s10 = scalar_select 0, %s9, %s7
  $region1: #{tpu_custom_call.1} parent=0
    #allocation4 [shape = 'u8[32768]{0}', space=vmem, size = 0x8000, scoped, tag = 'input window, operand 0']
    #allocation5 [shape = 's32[2]{0}', space=sflag, size = 0x8, scoped, tag = 'scoped memory for tpu_custom_call.1']
    #allocation6 [shape = 's32[2]{0}', space=sflag, size = 0x8, scoped, tag = 'scoped memory for tpu_custom_call.1']
    #allocation7 [shape = 'u8[4096]{0}', space=vmem, size = 0x1000, scoped, tag = 'input window, operand 1, single buffered']
    #allocation8 [shape = 's32[1]{0}', space=sflag, size = 0x4, scoped, tag = 'scoped memory for tpu_custom_call.1']
    #allocation9 [shape = 'u8[16384]{0}', space=vmem, size = 0x4000, scoped, tag = 'input window, operand 2, single buffered']
    #allocation10 [shape = 'u8[16384]{0}', space=vmem, size = 0x4000, scoped, tag = 'input window, operand 3, single buffered']
    #allocation11 [shape = 's32[1]{0}', space=sflag, size = 0x4, scoped, tag = 'scoped memory for tpu_custom_call.1']
    #allocation12 [shape = 'u8[32768]{0}', space=vmem, size = 0x8000, scoped, tag = 'output window, operand 0']
    %11 = vsyncpa [#allocation5], 0
    %s12 = scalar_lea.sflag [#allocation5], 1
    %13 = vsyncpa %s12, 0
    %14 = vsyncpa [#allocation8], 0
    %15 = vsyncpa [#allocation11], 0
    %16 = vsyncpa [#allocation6], 0
    %s17 = scalar_lea.sflag [#allocation6], 1
    %18 = vsyncpa %s17, 0
    loop: start=0, step=1, limit=4
    $region2: #{tpu_custom_call.1} parent=1 // loop_pre_header
      _
    $region3: #{tpu_custom_call.1} parent=1 // loop_header
      %s20 = sphi 0, %s24
      %p21 = scmp.ge.s32.totalorder %s20, 4
      %s30 = sphi 0, %s32
      %s33 = sphi 0, %s30
      %s34 = sphi 0, %s33
      %s50 = sphi 0, %s34
      %s54 = sphi 0, %s54
      %s56 = sphi 0, %s54
      %s57 = sphi 0, %s56
      %s71 = sphi 0, %s57
      %s75 = sphi 0, %s75
      %s77 = sphi 0, %s75
      %s78 = sphi 0, %s77
      %s92 = sphi 0, %s78
      %s96 = sphi 0, %s96
      %s98 = sphi 0, %s96
      %s99 = sphi 0, %s98
      %s113 = sphi 0, %s99
      %s117 = sphi 0, %s117
      %s119 = sphi 0, %s117
      %s120 = sphi 0, %s119
      %s134 = sphi 0, %s120
      %s138 = sphi 0, %s138
      %s140 = sphi 0, %s138
      %s141 = sphi 0, %s140
      %s155 = sphi 0, %s141
      %s161 = sphi 0, %s163
      %s164 = sphi 0, %s161
      %s165 = sphi 0, %s164
      %s181 = sphi 0, %s165
    $region4: #{tpu_custom_call.1} parent=1 // loop_header_branch
      %23 = sbr.rel (%p21) target = $region8
    $region5: #{tpu_custom_call.1} parent=1 // loop_body
      %s25 = ssub.s32 %s20, 1
      %s26 = ssub.s32 %s20, 2
      %s27 = sadd.s32 %s20, 1
      %s28 = ssub.s32 %s20, %s27
      %p29 = scmp.eq.s32.totalorder %s28, 0
      %s31 = sadd.s32 %s30, 1
      %s32 = scalar_select %p29, %s30, %s31
      %p35 = pneg %p29
      %p36 = scmp.eq.s32.totalorder %s20, 1
      %p37 = por %p35, %p36
      %p38 = scmp.ne.s32.totalorder %s30, %s33
      %p39 = scmp.eq.s32.totalorder %s20, 0
      %p40 = por %p38, %p39
      %p41 = scmp.ne.s32.totalorder %s30, %s33
      %p42 = scmp.eq.s32.totalorder %s25, 1
      %p43 = por %p41, %p42
      %p44 = scmp.ne.s32.totalorder %s33, %s34
      %p45 = scmp.eq.s32.totalorder %s25, 0
      %p46 = por %p44, %p45
      %p47 = scmp.ne.s32.totalorder %s33, %s34
      %p48 = scmp.eq.s32.totalorder %s26, 1
      %p49 = por %p47, %p48
      %p51 = scmp.ne.s32.totalorder %s34, %s50
      %p52 = scmp.eq.s32.totalorder %s26, 0
      %p53 = por %p51, %p52
      %s55 = sadd.s32 %s54, 1
      %p58 = scmp.eq.s32.totalorder %s20, 1
      %p59 = scmp.ne.s32.totalorder %s54, %s56
      %p60 = scmp.eq.s32.totalorder %s20, 0
      %p61 = por %p59, %p60
      %p62 = scmp.ne.s32.totalorder %s54, %s56
      %p63 = scmp.eq.s32.totalorder %s25, 1
      %p64 = por %p62, %p63
      %p65 = scmp.ne.s32.totalorder %s56, %s57
      %p66 = scmp.eq.s32.totalorder %s25, 0
      %p67 = por %p65, %p66
      %p68 = scmp.ne.s32.totalorder %s56, %s57
      %p69 = scmp.eq.s32.totalorder %s26, 1
      %p70 = por %p68, %p69
      %p72 = scmp.ne.s32.totalorder %s57, %s71
      %p73 = scmp.eq.s32.totalorder %s26, 0
      %p74 = por %p72, %p73
      %s76 = sadd.s32 %s75, 1
      %p79 = scmp.eq.s32.totalorder %s20, 1
      %p80 = scmp.ne.s32.totalorder %s75, %s77
      %p81 = scmp.eq.s32.totalorder %s20, 0
      %p82 = por %p80, %p81
      %p83 = scmp.ne.s32.totalorder %s75, %s77
      %p84 = scmp.eq.s32.totalorder %s25, 1
      %p85 = por %p83, %p84
      %p86 = scmp.ne.s32.totalorder %s77, %s78
      %p87 = scmp.eq.s32.totalorder %s25, 0
      %p88 = por %p86, %p87
      %p89 = scmp.ne.s32.totalorder %s77, %s78
      %p90 = scmp.eq.s32.totalorder %s26, 1
      %p91 = por %p89, %p90
      %p93 = scmp.ne.s32.totalorder %s78, %s92
      %p94 = scmp.eq.s32.totalorder %s26, 0
      %p95 = por %p93, %p94
      %s97 = sadd.s32 %s96, 1
      %p100 = scmp.eq.s32.totalorder %s20, 1
      %p101 = scmp.ne.s32.totalorder %s96, %s98
      %p102 = scmp.eq.s32.totalorder %s20, 0
      %p103 = por %p101, %p102
      %p104 = scmp.ne.s32.totalorder %s96, %s98
      %p105 = scmp.eq.s32.totalorder %s25, 1
      %p106 = por %p104, %p105
      %p107 = scmp.ne.s32.totalorder %s98, %s99
      %p108 = scmp.eq.s32.totalorder %s25, 0
      %p109 = por %p107, %p108
      %p110 = scmp.ne.s32.totalorder %s98, %s99
      %p111 = scmp.eq.s32.totalorder %s26, 1
      %p112 = por %p110, %p111
      %p114 = scmp.ne.s32.totalorder %s99, %s113
      %p115 = scmp.eq.s32.totalorder %s26, 0
      %p116 = por %p114, %p115
      %s118 = sadd.s32 %s117, 1
      %p121 = scmp.eq.s32.totalorder %s20, 1
      %p122 = scmp.ne.s32.totalorder %s117, %s119
      %p123 = scmp.eq.s32.totalorder %s20, 0
      %p124 = por %p122, %p123
      %p125 = scmp.ne.s32.totalorder %s117, %s119
      %p126 = scmp.eq.s32.totalorder %s25, 1
      %p127 = por %p125, %p126
      %p128 = scmp.ne.s32.totalorder %s119, %s120
      %p129 = scmp.eq.s32.totalorder %s25, 0
      %p130 = por %p128, %p129
      %p131 = scmp.ne.s32.totalorder %s119, %s120
      %p132 = scmp.eq.s32.totalorder %s26, 1
      %p133 = por %p131, %p132
      %p135 = scmp.ne.s32.totalorder %s120, %s134
      %p136 = scmp.eq.s32.totalorder %s26, 0
      %p137 = por %p135, %p136
      %s139 = sadd.s32 %s138, 1
      %p142 = scmp.eq.s32.totalorder %s20, 1
      %p143 = scmp.ne.s32.totalorder %s138, %s140
      %p144 = scmp.eq.s32.totalorder %s20, 0
      %p145 = por %p143, %p144
      %p146 = scmp.ne.s32.totalorder %s138, %s140
      %p147 = scmp.eq.s32.totalorder %s25, 1
      %p148 = por %p146, %p147
      %p149 = scmp.ne.s32.totalorder %s140, %s141
      %p150 = scmp.eq.s32.totalorder %s25, 0
      %p151 = por %p149, %p150
      %p152 = scmp.ne.s32.totalorder %s140, %s141
      %p153 = scmp.eq.s32.totalorder %s26, 1
      %p154 = por %p152, %p153
      %p156 = scmp.ne.s32.totalorder %s141, %s155
      %p157 = scmp.eq.s32.totalorder %s26, 0
      %p158 = por %p156, %p157
      %s159 = ssub.s32 %s20, %s27
      %p160 = scmp.eq.s32.totalorder %s159, 0
      %s162 = sadd.s32 %s161, 1
      %s163 = scalar_select %p160, %s161, %s162
      %p166 = pneg %p160
      %p167 = scmp.eq.s32.totalorder %s20, 1
      %p168 = por %p166, %p167
      %p169 = scmp.ne.s32.totalorder %s161, %s164
      %p170 = scmp.eq.s32.totalorder %s20, 0
      %p171 = por %p169, %p170
      %p172 = scmp.ne.s32.totalorder %s161, %s164
      %p173 = scmp.eq.s32.totalorder %s25, 1
      %p174 = por %p172, %p173
      %p175 = scmp.ne.s32.totalorder %s164, %s165
      %p176 = scmp.eq.s32.totalorder %s25, 0
      %p177 = por %p175, %p176
      %p178 = scmp.ne.s32.totalorder %s164, %s165
      %p179 = scmp.eq.s32.totalorder %s26, 1
      %p180 = por %p178, %p179
      %p182 = scmp.ne.s32.totalorder %s165, %s181
      %p183 = scmp.eq.s32.totalorder %s26, 0
      %p184 = por %p182, %p183
      %p185 = scmp.le.s32.totalorder 1, %s20
      %p186 = scmp.lt.s32.totalorder %s20, 3
      %p187 = pnand %p185, %p186
      %p188 = pneg %p187
      // Predicated region
      $region9: #{tpu_custom_call.1} parent=5 // pred_check
        _
      $region10: #{tpu_custom_call.1} parent=5 // pred_check_branch
        %190 = sbr.rel (%p187) target = $region12
      $region11: #{tpu_custom_call.1} parent=5 // pred_region
        %s191 = ssub.s32 %s20, 1
        // Predicated region
        $region13: #{tpu_custom_call.1} parent=11 // pred_check
          %p192 = pneg %p67
        $region14: #{tpu_custom_call.1} parent=11 // pred_check_branch
          %194 = sbr.rel (%p192) target = $region16
        $region15: #{tpu_custom_call.1} parent=11 // pred_region
          %s196 = ssub.s32 128, 128
          %197 = vsyncadd [#allocation8], %s196
          %s199 = sshll.u32 [#allocation7], 4
          %s200 = int_to_ptr.vmem [resolvable:$true] %s199
          %202 = dma.hbm_to_vmem [thread:$0]  %s1, 128, %s200, [#allocation8]
        $region16: #{tpu_custom_call.1} parent=11 // pred_fallthru
          _
        // Predicated region
        $region17: #{tpu_custom_call.1} parent=11 // pred_check
          %p203 = pneg %p88
        $region18: #{tpu_custom_call.1} parent=11 // pred_check_branch
          %205 = sbr.rel (%p203) target = $region20
        $region19: #{tpu_custom_call.1} parent=11 // pred_region
          %s207 = ssub.s32 512, 512
          %208 = vsyncadd [#allocation8], %s207
          %s209 = sshll.u32 [#allocation9], 4
          %s210 = int_to_ptr.vmem [resolvable:$true] %s209
          %215 = dma.hbm_to_vmem [thread:$0]  %s2, 512, %s210, [#allocation8], 128, 128, 8
        $region20: #{tpu_custom_call.1} parent=11 // pred_fallthru
          _
        // Predicated region
        $region21: #{tpu_custom_call.1} parent=11 // pred_check
          %p216 = pneg %p109
        $region22: #{tpu_custom_call.1} parent=11 // pred_check_branch
          %218 = sbr.rel (%p216) target = $region24
        $region23: #{tpu_custom_call.1} parent=11 // pred_region
          %s220 = ssub.s32 512, 512
          %221 = vsyncadd [#allocation11], %s220
          %s222 = sshll.u32 [#allocation10], 4
          %s223 = int_to_ptr.vmem [resolvable:$true] %s222
          %228 = dma.hbm_to_vmem [thread:$0]  %s3, 512, %s223, [#allocation11], 128, 128, 8
        $region24: #{tpu_custom_call.1} parent=11 // pred_fallthru
          _
        // Predicated region
        $region25: #{tpu_custom_call.1} parent=11 // pred_check
          %p229 = pneg %p130
        $region26: #{tpu_custom_call.1} parent=11 // pred_check_branch
          %231 = sbr.rel (%p229) target = $region28
        $region27: #{tpu_custom_call.1} parent=11 // pred_region
          _
        $region28: #{tpu_custom_call.1} parent=11 // pred_fallthru
          _
        // Predicated region
        $region29: #{tpu_custom_call.1} parent=11 // pred_check
          %p232 = pneg %p151
        $region30: #{tpu_custom_call.1} parent=11 // pred_check_branch
          %234 = sbr.rel (%p232) target = $region32
        $region31: #{tpu_custom_call.1} parent=11 // pred_region
          _
        $region32: #{tpu_custom_call.1} parent=11 // pred_fallthru
          _
      $region12: #{tpu_custom_call.1} parent=5 // pred_fallthru
        _
      %p235 = scmp.lt.s32.totalorder %s20, 2
      // Predicated region
      $region33: #{tpu_custom_call.1} parent=5 // pred_check
        %p236 = pneg %p235
      $region34: #{tpu_custom_call.1} parent=5 // pred_check_branch
        %238 = sbr.rel (%p236) target = $region36
      $region35: #{tpu_custom_call.1} parent=5 // pred_region
        // Predicated region
        $region37: #{tpu_custom_call.1} parent=35 // pred_check
          %p239 = pneg %p40
        $region38: #{tpu_custom_call.1} parent=35 // pred_check_branch
          %241 = sbr.rel (%p239) target = $region40
        $region39: #{tpu_custom_call.1} parent=35 // pred_region
          %s242 = sand.u32 %s30, 1
          %s243 = scalar_lea.sflag [#allocation5], %s242
          %s244 = sand.u32 %s30, 1
          %s245 = smul.addr %s244, 32
          %s246 = scalar_lea.vmem [#allocation4], %s245
          %s247 = smul.u32 4, %s20
          %s249 = ssub.s32 512, 512
          %250 = vsyncadd %s243, %s249
          %s251 = smul.addr %s247, 128
          %s252 = scalar_lea.hbm %s0, %s251
          %s253 = sshll.u32 %s246, 4
          %s254 = int_to_ptr.vmem [resolvable:$true] %s253
          %259 = dma.hbm_to_vmem [thread:$0]  %s252, 512, %s254, %s243, 128, 128, 8
        $region40: #{tpu_custom_call.1} parent=35 // pred_fallthru
          _
      $region36: #{tpu_custom_call.1} parent=5 // pred_fallthru
        _
      %p260 = scmp.le.s32.totalorder 1, %s20
      %p261 = scmp.lt.s32.totalorder %s20, 3
      %p262 = pnand %p260, %p261
      %p263 = pneg %p262
      // Predicated region
      $region41: #{tpu_custom_call.1} parent=5 // pred_check
        _
      $region42: #{tpu_custom_call.1} parent=5 // pred_check_branch
        %265 = sbr.rel (%p262) target = $region44
      $region43: #{tpu_custom_call.1} parent=5 // pred_region
        %s266 = ssub.s32 %s20, 1
        %s267 = sand.u32 %s33, 1
        %s268 = scalar_lea.sflag [#allocation5], %s267
        %s269 = sand.u32 %s33, 1
        %s270 = smul.addr %s269, 32
        %s271 = scalar_lea.vmem [#allocation4], %s270
        // Predicated region
        $region45: #{tpu_custom_call.1} parent=43 // pred_check
          %p272 = pneg %p46
        $region46: #{tpu_custom_call.1} parent=43 // pred_check_branch
          %274 = sbr.rel (%p272) target = $region48
        $region47: #{tpu_custom_call.1} parent=43 // pred_region
          %275 = dma.done %s268, 512
        $region48: #{tpu_custom_call.1} parent=43 // pred_fallthru
          _
        // Predicated region
        $region49: #{tpu_custom_call.1} parent=43 // pred_check
          %p276 = pneg %p67
        $region50: #{tpu_custom_call.1} parent=43 // pred_check_branch
          %278 = sbr.rel (%p276) target = $region52
        $region51: #{tpu_custom_call.1} parent=43 // pred_region
          %279 = dma.done [#allocation8], 128
        $region52: #{tpu_custom_call.1} parent=43 // pred_fallthru
          _
        // Predicated region
        $region53: #{tpu_custom_call.1} parent=43 // pred_check
          %p280 = pneg %p88
        $region54: #{tpu_custom_call.1} parent=43 // pred_check_branch
          %282 = sbr.rel (%p280) target = $region56
        $region55: #{tpu_custom_call.1} parent=43 // pred_region
          %283 = dma.done [#allocation8], 512
        $region56: #{tpu_custom_call.1} parent=43 // pred_fallthru
          _
        // Predicated region
        $region57: #{tpu_custom_call.1} parent=43 // pred_check
          %p284 = pneg %p109
        $region58: #{tpu_custom_call.1} parent=43 // pred_check_branch
          %286 = sbr.rel (%p284) target = $region60
        $region59: #{tpu_custom_call.1} parent=43 // pred_region
          %287 = dma.done [#allocation11], 512
        $region60: #{tpu_custom_call.1} parent=43 // pred_fallthru
          _
        %s288 = sand.u32 %s33, 1
        %s289 = scalar_lea.sflag [#allocation5], %s288
        %s290 = sand.u32 %s33, 1
        %s291 = smul.addr %s290, 32
        %s292 = scalar_lea.vmem [#allocation4], %s291
        %p293 = pneg %p46
        %p294 = pneg %p43
        %p295 = pneg %p67
        %p296 = pneg %p64
        %p297 = pneg %p88
        %p298 = pneg %p85
        %p299 = pneg %p109
        %p300 = pneg %p106
        %p301 = pneg %p130
        %p302 = pneg %p127
        %p303 = pneg %p151
        %p304 = pneg %p148
        %p305 = pneg %p177
        %p306 = pneg %p174
        %s307 = sand.u32 %s164, 1
        %s308 = scalar_lea.sflag [#allocation6], %s307
        %s309 = sand.u32 %s164, 1
        %s310 = smul.addr %s309, 32
        %s311 = scalar_lea.vmem [#allocation12], %s310
        %s312 = smul.u32 4, %s25
        %s313 = smul.u32 4, %s25
        %p314 = scmp.eq.s32.totalorder %s25, 0
        // Predicated region
        $region61: #{tpu_custom_call.1} parent=43 // pred_check
          %p315 = pneg %p314
        $region62: #{tpu_custom_call.1} parent=43 // pred_check_branch
          %317 = sbr.rel (%p315) target = $region64
        $region63: #{tpu_custom_call.1} parent=43 // pred_region
          %v318 = vld [vmem:[#allocation7] sm:$0xff]
          %vm319 = vcmask 261120
          %320 = vst.msk [vmem:[#allocation3] sm:$0xff] %vm319, %v318
        $region64: #{tpu_custom_call.1} parent=43 // pred_fallthru
          _
        %v321 = vld [vmem:[%s271] sm:$0xff]
        %v322 = vld [vmem:[%s271 + $0x8] sm:$0xff]
        %v323 = vld [vmem:[%s271 + $0x10] sm:$0xff]
        %v324 = vld [vmem:[%s271 + $0x18] sm:$0xff]
        %v325 = vld [vmem:[#allocation9] sm:$0xff]
        %v326 = vld [vmem:[#allocation9 + $0x8] sm:$0xff]
        %v327 = vld [vmem:[#allocation9 + $0x10] sm:$0xff]
        %v328 = vld [vmem:[#allocation9 + $0x18] sm:$0xff]
        %v329 = vld [vmem:[%s4] sm:$0x1]
        %v331 = vlaneseq
        %v332 = vshrl.u32 %v331, 7
        %v333 = vsub.s32 0, %v332
        %v334 = vrot.slane %v329, %v333
        %vm336 = vcmask 261120
        %v338 = vsel %vm336, %v321, 0
        %v341 = vsel %vm336, %v322, 0
        %v344 = vsel %vm336, %v323, 0
        %v347 = vsel %vm336, %v324, 0
        %349 = vmatprep.subr.mxu0 0.0
        %350 = vmatpush1.msra.mxu0 %v325
        %351 = vmatprep.subr.mxu0 0.0
        %352 = vmatpush1.msra.mxu0 %v326
        %353 = vmatprep.subr.mxu0 0.0
        %354 = vmatpush1.msra.mxu0 %v327
        %355 = vmatprep.subr.mxu0 0.0
        %356 = vmatpush1.msra.mxu0 %v328
        %357 = vmatprep.subr.mxu0 0.0
        %358 = vmatpush1.msra.mxu0 0.0
        %359 = vmatprep.subr.mxu0 0.0
        %360 = vmatpush1.msra.mxu0 0.0
        %361 = vmatprep.subr.mxu0 0.0
        %362 = vmatpush1.msra.mxu0 0.0
        %363 = vmatprep.subr.mxu0 0.0
        %364 = vmatpush1.msra.mxu0 0.0
        %365 = vmatprep.subr.mxu0 0.0
        %366 = vmatpush1.msra.mxu0 0.0
        %367 = vmatprep.subr.mxu0 0.0
        %368 = vmatpush1.msra.mxu0 0.0
        %369 = vmatprep.subr.mxu0 0.0
        %370 = vmatpush1.msra.mxu0 0.0
        %371 = vmatprep.subr.mxu0 0.0
        %372 = vmatpush1.msra.mxu0 0.0
        %373 = vmatprep.subr.mxu0 0.0
        %374 = vmatpush1.msra.mxu0 0.0
        %375 = vmatprep.subr.mxu0 0.0
        %376 = vmatpush1.msra.mxu0 0.0
        %377 = vmatprep.subr.mxu0 0.0
        %378 = vmatpush1.msra.mxu0 0.0
        %379 = vmatprep.subr.mxu0 0.0
        %380 = vmatpush1.msra.mxu0 0.0
        %381 = vmatprep.subr.mxu0 0.0
        %382 = vmatpush1.msra.mxu0 0.0
        %383 = vmatprep.subr.mxu0 0.0
        %384 = vmatpush1.msra.mxu0 0.0
        %385 = vmatprep.subr.mxu0 0.0
        %386 = vmatpush1.msra.mxu0 0.0
        %387 = vmatprep.subr.mxu0 0.0
        %388 = vmatpush1.msra.mxu0 0.0
        %389 = vmatprep.subr.mxu0 0.0
        %390 = vmatpush1.msra.mxu0 0.0
        %391 = vmatprep.subr.mxu0 0.0
        %392 = vmatpush1.msra.mxu0 0.0
        %393 = vmatprep.subr.mxu0 0.0
        %394 = vmatpush1.msra.mxu0 0.0
        %395 = vmatprep.subr.mxu0 0.0
        %396 = vmatpush1.msra.mxu0 0.0
        %397 = vmatprep.subr.mxu0 0.0
        %398 = vmatpush1.msra.mxu0 0.0
        %399 = vmatprep.subr.mxu0 0.0
        %400 = vmatpush1.msra.mxu0 0.0
        %401 = vmatprep.subr.mxu0 0.0
        %402 = vmatpush1.msra.mxu0 0.0
        %403 = vmatprep.subr.mxu0 0.0
        %404 = vmatpush1.msra.mxu0 0.0
        %405 = vmatprep.subr.mxu0 0.0
        %406 = vmatpush1.msra.mxu0 0.0
        %407 = vmatprep.subr.mxu0 0.0
        %408 = vmatpush1.msra.mxu0 0.0
        %409 = vmatprep.subr.mxu0 0.0
        %410 = vmatpush1.msra.mxu0 0.0
        %411 = vmatprep.subr.mxu0 0.0
        %412 = vmatpush1.msra.mxu0 0.0
        %413 = vmatprep.mubr.f32.mxu0 0.0
        %414 = vmatmul.mubr.f32.gmra.mrb[0].mxu0 %v338
        %v415 = vpop.f32.mrb[0].mxu0
        %v416 = vadd.f32 %v334, %v415
        %v417 = vpop.f32.mrb[0].mxu0
        %418 = vmatprep.mubr.f32.mxu0 0.0
        %419 = vmatmul.mubr.f32.gmra.mrb[0].mxu0 %v341
        %v420 = vpop.f32.mrb[0].mxu0
        %v421 = vadd.f32 %v334, %v420
        %v422 = vpop.f32.mrb[0].mxu0
        %423 = vmatprep.mubr.f32.mxu0 0.0
        %424 = vmatmul.mubr.f32.gmra.mrb[0].mxu0 %v344
        %v425 = vpop.f32.mrb[0].mxu0
        %v426 = vadd.f32 %v334, %v425
        %v427 = vpop.f32.mrb[0].mxu0
        %428 = vmatprep.mubr.f32.mxu0 0.0
        %429 = vmatmul.mubr.f32.gmra.mrb[0].mxu0 %v347
        %v430 = vpop.f32.mrb[0].mxu0
        %v431 = vadd.f32 %v334, %v430
        %v432 = vpop.f32.mrb[0].mxu0
        %433 = vdwg.mxu0
        %vm434 = vcmask 785408
        %435 = vst.msk [vmem:[#allocation2] sm:$0xff] %vm434, %v416
        %436 = vst.msk [vmem:[#allocation2 + $0x8] sm:$0xff] %vm434, %v421
        %437 = vst.msk [vmem:[#allocation2 + $0x10] sm:$0xff] %vm434, %v426
        %438 = vst.msk [vmem:[#allocation2 + $0x18] sm:$0xff] %vm434, %v431
        %v439 = vld [vmem:[#allocation10] sm:$0xff]
        %v440 = vld [vmem:[#allocation10 + $0x8] sm:$0xff]
        %v441 = vld [vmem:[#allocation10 + $0x10] sm:$0xff]
        %v442 = vld [vmem:[#allocation10 + $0x18] sm:$0xff]
        %v443 = vld [vmem:[%s5] sm:$0x1]
        %v445 = vlaneseq
        %v446 = vshrl.u32 %v445, 7
        %v447 = vsub.s32 0, %v446
        %v448 = vrot.slane %v443, %v447
        %v449 = vld [vmem:[#allocation3] sm:$0xff]
        %v450 = vld [vmem:[#allocation2] sm:$0xff]
        %v452 = vsel %vm336, %v449, 0
        %454 = vmatprep.subr.mxu0 0.0
        %455 = vmatpush1.msra.mxu0 %v439
        %456 = vmatprep.subr.mxu0 0.0
        %457 = vmatpush1.msra.mxu0 %v440
        %458 = vmatprep.subr.mxu0 0.0
        %459 = vmatpush1.msra.mxu0 %v441
        %460 = vmatprep.subr.mxu0 0.0
        %461 = vmatpush1.msra.mxu0 %v442
        %462 = vmatprep.subr.mxu0 0.0
        %463 = vmatpush1.msra.mxu0 0.0
        %464 = vmatprep.subr.mxu0 0.0
        %465 = vmatpush1.msra.mxu0 0.0
        %466 = vmatprep.subr.mxu0 0.0
        %467 = vmatpush1.msra.mxu0 0.0
        %468 = vmatprep.subr.mxu0 0.0
        %469 = vmatpush1.msra.mxu0 0.0
        %470 = vmatprep.subr.mxu0 0.0
        %471 = vmatpush1.msra.mxu0 0.0
        %472 = vmatprep.subr.mxu0 0.0
        %473 = vmatpush1.msra.mxu0 0.0
        %474 = vmatprep.subr.mxu0 0.0
        %475 = vmatpush1.msra.mxu0 0.0
        %476 = vmatprep.subr.mxu0 0.0
        %477 = vmatpush1.msra.mxu0 0.0
        %478 = vmatprep.subr.mxu0 0.0
        %479 = vmatpush1.msra.mxu0 0.0
        %480 = vmatprep.subr.mxu0 0.0
        %481 = vmatpush1.msra.mxu0 0.0
        %482 = vmatprep.subr.mxu0 0.0
        %483 = vmatpush1.msra.mxu0 0.0
        %484 = vmatprep.subr.mxu0 0.0
        %485 = vmatpush1.msra.mxu0 0.0
        %486 = vmatprep.subr.mxu0 0.0
        %487 = vmatpush1.msra.mxu0 0.0
        %488 = vmatprep.subr.mxu0 0.0
        %489 = vmatpush1.msra.mxu0 0.0
        %490 = vmatprep.subr.mxu0 0.0
        %491 = vmatpush1.msra.mxu0 0.0
        %492 = vmatprep.subr.mxu0 0.0
        %493 = vmatpush1.msra.mxu0 0.0
        %494 = vmatprep.subr.mxu0 0.0
        %495 = vmatpush1.msra.mxu0 0.0
        %496 = vmatprep.subr.mxu0 0.0
        %497 = vmatpush1.msra.mxu0 0.0
        %498 = vmatprep.subr.mxu0 0.0
        %499 = vmatpush1.msra.mxu0 0.0
        %500 = vmatprep.subr.mxu0 0.0
        %501 = vmatpush1.msra.mxu0 0.0
        %502 = vmatprep.subr.mxu0 0.0
        %503 = vmatpush1.msra.mxu0 0.0
        %504 = vmatprep.subr.mxu0 0.0
        %505 = vmatpush1.msra.mxu0 0.0
        %506 = vmatprep.subr.mxu0 0.0
        %507 = vmatpush1.msra.mxu0 0.0
        %508 = vmatprep.subr.mxu0 0.0
        %509 = vmatpush1.msra.mxu0 0.0
        %510 = vmatprep.subr.mxu0 0.0
        %511 = vmatpush1.msra.mxu0 0.0
        %512 = vmatprep.subr.mxu0 0.0
        %513 = vmatpush1.msra.mxu0 0.0
        %514 = vmatprep.subr.mxu0 0.0
        %515 = vmatpush1.msra.mxu0 0.0
        %516 = vmatprep.subr.mxu0 0.0
        %517 = vmatpush1.msra.mxu0 0.0
        %518 = vmatprep.mubr.f32.mxu0 0.0
        %519 = vmatmul.mubr.f32.gmra.mrb[0].mxu0 %v452
        %v520 = vpop.f32.mrb[0].mxu0
        %v521 = vadd.f32 0.0, %v520
        %v522 = vpop.f32.mrb[0].mxu0
        %523 = vdwg.mxu0
        %v524 = vadd.f32 %v450, %v521
        %v525 = vxor.u32 %v524, 2147483648
        %v526 = vmul.f32 %v525, 1.442695
        %v527 = vpow.pop %v526
        %v528 = vadd.f32 %v527, 1.0
        %v529 = vrcp.pop %v528
        %v530 = vmul.f32 1.0, %v529
        %531 = vrot.lane.b32.xlu0 %v448, 64
        %v532 = vpop.permute.xlu0 %531
        %v534 = vadd.f32 %v521, %v532
        %536 = vrot.lane.b32.xlu0 %v534, 64
        %v537 = vpop.permute.xlu0 %536
        %v539 = vmul.f32 %v530, %v537
        %541 = vrot.lane.b32.xlu0 %v539, 64
        %v542 = vpop.permute.xlu0 %541
        %v544 = vadd.f32 %v450, %v542
        %v545 = vtanh.pop %v544
        %547 = vrot.lane.b32.xlu0 %v545, 64
        %v548 = vpop.permute.xlu0 %547
        %v550 = vsub.f32 %v449, %v548
        %552 = vrot.lane.b32.xlu0 %v550, 32
        %v553 = vpop.permute.xlu0 %552
        %v555 = vmul.f32 %v530, %v553
        %557 = vrot.lane.b32.xlu0 %v555, 32
        %v558 = vpop.permute.xlu0 %557
        %v560 = vadd.f32 %v545, %v558
        %562 = vrot.lane.b32.xlu0 %v560, 64
        %v563 = vpop.permute.xlu0 %562
        %565 = vst.msk [vmem:[#allocation3] sm:$0xff] %vm336, %v563
        %566 = vst.msk [vmem:[%s311] sm:$0xff] %vm336, %v563
        %v567 = vld [vmem:[#allocation3] sm:$0xff]
        %s568 = scalar_lea.vmem [#allocation2], 8
        %v569 = vld [vmem:[%s568] sm:$0xff]
        %v571 = vsel %vm336, %v567, 0
        %573 = vmatprep.subr.mxu0 0.0
        %574 = vmatpush1.msra.mxu0 %v439
        %575 = vmatprep.subr.mxu0 0.0
        %576 = vmatpush1.msra.mxu0 %v440
        %577 = vmatprep.subr.mxu0 0.0
        %578 = vmatpush1.msra.mxu0 %v441
        %579 = vmatprep.subr.mxu0 0.0
        %580 = vmatpush1.msra.mxu0 %v442
        %581 = vmatprep.subr.mxu0 0.0
        %582 = vmatpush1.msra.mxu0 0.0
        %583 = vmatprep.subr.mxu0 0.0
        %584 = vmatpush1.msra.mxu0 0.0
        %585 = vmatprep.subr.mxu0 0.0
        %586 = vmatpush1.msra.mxu0 0.0
        %587 = vmatprep.subr.mxu0 0.0
        %588 = vmatpush1.msra.mxu0 0.0
        %589 = vmatprep.subr.mxu0 0.0
        %590 = vmatpush1.msra.mxu0 0.0
        %591 = vmatprep.subr.mxu0 0.0
        %592 = vmatpush1.msra.mxu0 0.0
        %593 = vmatprep.subr.mxu0 0.0
        %594 = vmatpush1.msra.mxu0 0.0
        %595 = vmatprep.subr.mxu0 0.0
        %596 = vmatpush1.msra.mxu0 0.0
        %597 = vmatprep.subr.mxu0 0.0
        %598 = vmatpush1.msra.mxu0 0.0
        %599 = vmatprep.subr.mxu0 0.0
        %600 = vmatpush1.msra.mxu0 0.0
        %601 = vmatprep.subr.mxu0 0.0
        %602 = vmatpush1.msra.mxu0 0.0
        %603 = vmatprep.subr.mxu0 0.0
        %604 = vmatpush1.msra.mxu0 0.0
        %605 = vmatprep.subr.mxu0 0.0
        %606 = vmatpush1.msra.mxu0 0.0
        %607 = vmatprep.subr.mxu0 0.0
        %608 = vmatpush1.msra.mxu0 0.0
        %609 = vmatprep.subr.mxu0 0.0
        %610 = vmatpush1.msra.mxu0 0.0
        %611 = vmatprep.subr.mxu0 0.0
        %612 = vmatpush1.msra.mxu0 0.0
        %613 = vmatprep.subr.mxu0 0.0
        %614 = vmatpush1.msra.mxu0 0.0
        %615 = vmatprep.subr.mxu0 0.0
        %616 = vmatpush1.msra.mxu0 0.0
        %617 = vmatprep.subr.mxu0 0.0
        %618 = vmatpush1.msra.mxu0 0.0
        %619 = vmatprep.subr.mxu0 0.0
        %620 = vmatpush1.msra.mxu0 0.0
        %621 = vmatprep.subr.mxu0 0.0
        %622 = vmatpush1.msra.mxu0 0.0
        %623 = vmatprep.subr.mxu0 0.0
        %624 = vmatpush1.msra.mxu0 0.0
        %625 = vmatprep.subr.mxu0 0.0
        %626 = vmatpush1.msra.mxu0 0.0
        %627 = vmatprep.subr.mxu0 0.0
        %628 = vmatpush1.msra.mxu0 0.0
        %629 = vmatprep.subr.mxu0 0.0
        %630 = vmatpush1.msra.mxu0 0.0
        %631 = vmatprep.subr.mxu0 0.0
        %632 = vmatpush1.msra.mxu0 0.0
        %633 = vmatprep.subr.mxu0 0.0
        %634 = vmatpush1.msra.mxu0 0.0
        %635 = vmatprep.subr.mxu0 0.0
        %636 = vmatpush1.msra.mxu0 0.0
        %637 = vmatprep.mubr.f32.mxu0 0.0
        %638 = vmatmul.mubr.f32.gmra.mrb[0].mxu0 %v571
        %v639 = vpop.f32.mrb[0].mxu0
        %v640 = vadd.f32 0.0, %v639
        %v641 = vpop.f32.mrb[0].mxu0
        %642 = vdwg.mxu0
        %v643 = vadd.f32 %v569, %v640
        %v644 = vxor.u32 %v643, 2147483648
        %v645 = vmul.f32 %v644, 1.442695
        %v646 = vpow.pop %v645
        %v647 = vadd.f32 %v646, 1.0
        %v648 = vrcp.pop %v647
        %v649 = vmul.f32 1.0, %v648
        %v650 = vadd.f32 %v640, %v532
        %652 = vrot.lane.b32.xlu0 %v650, 64
        %v653 = vpop.permute.xlu0 %652
        %v655 = vmul.f32 %v649, %v653
        %657 = vrot.lane.b32.xlu0 %v655, 64
        %v658 = vpop.permute.xlu0 %657
        %v660 = vadd.f32 %v569, %v658
        %v661 = vtanh.pop %v660
        %663 = vrot.lane.b32.xlu0 %v661, 64
        %v664 = vpop.permute.xlu0 %663
        %v666 = vsub.f32 %v567, %v664
        %668 = vrot.lane.b32.xlu0 %v666, 32
        %v669 = vpop.permute.xlu0 %668
        %v671 = vmul.f32 %v649, %v669
        %673 = vrot.lane.b32.xlu0 %v671, 32
        %v674 = vpop.permute.xlu0 %673
        %v676 = vadd.f32 %v661, %v674
        %678 = vrot.lane.b32.xlu0 %v676, 64
        %v679 = vpop.permute.xlu0 %678
        %681 = vst.msk [vmem:[#allocation3] sm:$0xff] %vm336, %v679
        %s682 = scalar_lea.vmem %s311, 8 [#allocation12]
        %683 = vst.msk [vmem:[%s682] sm:$0xff] %vm336, %v679
        %v684 = vld [vmem:[#allocation3] sm:$0xff]
        %s685 = scalar_lea.vmem [#allocation2], 16
        %v686 = vld [vmem:[%s685] sm:$0xff]
        %v688 = vsel %vm336, %v684, 0
        %690 = vmatprep.subr.mxu0 0.0
        %691 = vmatpush1.msra.mxu0 %v439
        %692 = vmatprep.subr.mxu0 0.0
        %693 = vmatpush1.msra.mxu0 %v440
        %694 = vmatprep.subr.mxu0 0.0
        %695 = vmatpush1.msra.mxu0 %v441
        %696 = vmatprep.subr.mxu0 0.0
        %697 = vmatpush1.msra.mxu0 %v442
        %698 = vmatprep.subr.mxu0 0.0
        %699 = vmatpush1.msra.mxu0 0.0
        %700 = vmatprep.subr.mxu0 0.0
        %701 = vmatpush1.msra.mxu0 0.0
        %702 = vmatprep.subr.mxu0 0.0
        %703 = vmatpush1.msra.mxu0 0.0
        %704 = vmatprep.subr.mxu0 0.0
        %705 = vmatpush1.msra.mxu0 0.0
        %706 = vmatprep.subr.mxu0 0.0
        %707 = vmatpush1.msra.mxu0 0.0
        %708 = vmatprep.subr.mxu0 0.0
        %709 = vmatpush1.msra.mxu0 0.0
        %710 = vmatprep.subr.mxu0 0.0
        %711 = vmatpush1.msra.mxu0 0.0
        %712 = vmatprep.subr.mxu0 0.0
        %713 = vmatpush1.msra.mxu0 0.0
        %714 = vmatprep.subr.mxu0 0.0
        %715 = vmatpush1.msra.mxu0 0.0
        %716 = vmatprep.subr.mxu0 0.0
        %717 = vmatpush1.msra.mxu0 0.0
        %718 = vmatprep.subr.mxu0 0.0
        %719 = vmatpush1.msra.mxu0 0.0
        %720 = vmatprep.subr.mxu0 0.0
        %721 = vmatpush1.msra.mxu0 0.0
        %722 = vmatprep.subr.mxu0 0.0
        %723 = vmatpush1.msra.mxu0 0.0
        %724 = vmatprep.subr.mxu0 0.0
        %725 = vmatpush1.msra.mxu0 0.0
        %726 = vmatprep.subr.mxu0 0.0
        %727 = vmatpush1.msra.mxu0 0.0
        %728 = vmatprep.subr.mxu0 0.0
        %729 = vmatpush1.msra.mxu0 0.0
        %730 = vmatprep.subr.mxu0 0.0
        %731 = vmatpush1.msra.mxu0 0.0
        %732 = vmatprep.subr.mxu0 0.0
        %733 = vmatpush1.msra.mxu0 0.0
        %734 = vmatprep.subr.mxu0 0.0
        %735 = vmatpush1.msra.mxu0 0.0
        %736 = vmatprep.subr.mxu0 0.0
        %737 = vmatpush1.msra.mxu0 0.0
        %738 = vmatprep.subr.mxu0 0.0
        %739 = vmatpush1.msra.mxu0 0.0
        %740 = vmatprep.subr.mxu0 0.0
        %741 = vmatpush1.msra.mxu0 0.0
        %742 = vmatprep.subr.mxu0 0.0
        %743 = vmatpush1.msra.mxu0 0.0
        %744 = vmatprep.subr.mxu0 0.0
        %745 = vmatpush1.msra.mxu0 0.0
        %746 = vmatprep.subr.mxu0 0.0
        %747 = vmatpush1.msra.mxu0 0.0
        %748 = vmatprep.subr.mxu0 0.0
        %749 = vmatpush1.msra.mxu0 0.0
        %750 = vmatprep.subr.mxu0 0.0
        %751 = vmatpush1.msra.mxu0 0.0
        %752 = vmatprep.subr.mxu0 0.0
        %753 = vmatpush1.msra.mxu0 0.0
        %754 = vmatprep.mubr.f32.mxu0 0.0
        %755 = vmatmul.mubr.f32.gmra.mrb[0].mxu0 %v688
        %v756 = vpop.f32.mrb[0].mxu0
        %v757 = vadd.f32 0.0, %v756
        %v758 = vpop.f32.mrb[0].mxu0
        %759 = vdwg.mxu0
        %v760 = vadd.f32 %v686, %v757
        %v761 = vxor.u32 %v760, 2147483648
        %v762 = vmul.f32 %v761, 1.442695
        %v763 = vpow.pop %v762
        %v764 = vadd.f32 %v763, 1.0
        %v765 = vrcp.pop %v764
        %v766 = vmul.f32 1.0, %v765
        %v767 = vadd.f32 %v757, %v532
        %769 = vrot.lane.b32.xlu0 %v767, 64
        %v770 = vpop.permute.xlu0 %769
        %v772 = vmul.f32 %v766, %v770
        %774 = vrot.lane.b32.xlu0 %v772, 64
        %v775 = vpop.permute.xlu0 %774
        %v777 = vadd.f32 %v686, %v775
        %v778 = vtanh.pop %v777
        %780 = vrot.lane.b32.xlu0 %v778, 64
        %v781 = vpop.permute.xlu0 %780
        %v783 = vsub.f32 %v684, %v781
        %785 = vrot.lane.b32.xlu0 %v783, 32
        %v786 = vpop.permute.xlu0 %785
        %v788 = vmul.f32 %v766, %v786
        %790 = vrot.lane.b32.xlu0 %v788, 32
        %v791 = vpop.permute.xlu0 %790
        %v793 = vadd.f32 %v778, %v791
        %795 = vrot.lane.b32.xlu0 %v793, 64
        %v796 = vpop.permute.xlu0 %795
        %798 = vst.msk [vmem:[#allocation3] sm:$0xff] %vm336, %v796
        %s799 = scalar_lea.vmem %s311, 16 [#allocation12]
        %800 = vst.msk [vmem:[%s799] sm:$0xff] %vm336, %v796
        %v801 = vld [vmem:[#allocation3] sm:$0xff]
        %s802 = scalar_lea.vmem [#allocation2], 24
        %v803 = vld [vmem:[%s802] sm:$0xff]
        %v805 = vsel %vm336, %v801, 0
        %807 = vmatprep.subr.mxu0 0.0
        %808 = vmatpush1.msra.mxu0 %v439
        %809 = vmatprep.subr.mxu0 0.0
        %810 = vmatpush1.msra.mxu0 %v440
        %811 = vmatprep.subr.mxu0 0.0
        %812 = vmatpush1.msra.mxu0 %v441
        %813 = vmatprep.subr.mxu0 0.0
        %814 = vmatpush1.msra.mxu0 %v442
        %815 = vmatprep.subr.mxu0 0.0
        %816 = vmatpush1.msra.mxu0 0.0
        %817 = vmatprep.subr.mxu0 0.0
        %818 = vmatpush1.msra.mxu0 0.0
        %819 = vmatprep.subr.mxu0 0.0
        %820 = vmatpush1.msra.mxu0 0.0
        %821 = vmatprep.subr.mxu0 0.0
        %822 = vmatpush1.msra.mxu0 0.0
        %823 = vmatprep.subr.mxu0 0.0
        %824 = vmatpush1.msra.mxu0 0.0
        %825 = vmatprep.subr.mxu0 0.0
        %826 = vmatpush1.msra.mxu0 0.0
        %827 = vmatprep.subr.mxu0 0.0
        %828 = vmatpush1.msra.mxu0 0.0
        %829 = vmatprep.subr.mxu0 0.0
        %830 = vmatpush1.msra.mxu0 0.0
        %831 = vmatprep.subr.mxu0 0.0
        %832 = vmatpush1.msra.mxu0 0.0
        %833 = vmatprep.subr.mxu0 0.0
        %834 = vmatpush1.msra.mxu0 0.0
        %835 = vmatprep.subr.mxu0 0.0
        %836 = vmatpush1.msra.mxu0 0.0
        %837 = vmatprep.subr.mxu0 0.0
        %838 = vmatpush1.msra.mxu0 0.0
        %839 = vmatprep.subr.mxu0 0.0
        %840 = vmatpush1.msra.mxu0 0.0
        %841 = vmatprep.subr.mxu0 0.0
        %842 = vmatpush1.msra.mxu0 0.0
        %843 = vmatprep.subr.mxu0 0.0
        %844 = vmatpush1.msra.mxu0 0.0
        %845 = vmatprep.subr.mxu0 0.0
        %846 = vmatpush1.msra.mxu0 0.0
        %847 = vmatprep.subr.mxu0 0.0
        %848 = vmatpush1.msra.mxu0 0.0
        %849 = vmatprep.subr.mxu0 0.0
        %850 = vmatpush1.msra.mxu0 0.0
        %851 = vmatprep.subr.mxu0 0.0
        %852 = vmatpush1.msra.mxu0 0.0
        %853 = vmatprep.subr.mxu0 0.0
        %854 = vmatpush1.msra.mxu0 0.0
        %855 = vmatprep.subr.mxu0 0.0
        %856 = vmatpush1.msra.mxu0 0.0
        %857 = vmatprep.subr.mxu0 0.0
        %858 = vmatpush1.msra.mxu0 0.0
        %859 = vmatprep.subr.mxu0 0.0
        %860 = vmatpush1.msra.mxu0 0.0
        %861 = vmatprep.subr.mxu0 0.0
        %862 = vmatpush1.msra.mxu0 0.0
        %863 = vmatprep.subr.mxu0 0.0
        %864 = vmatpush1.msra.mxu0 0.0
        %865 = vmatprep.subr.mxu0 0.0
        %866 = vmatpush1.msra.mxu0 0.0
        %867 = vmatprep.subr.mxu0 0.0
        %868 = vmatpush1.msra.mxu0 0.0
        %869 = vmatprep.subr.mxu0 0.0
        %870 = vmatpush1.msra.mxu0 0.0
        %871 = vmatprep.mubr.f32.mxu0 0.0
        %872 = vmatmul.mubr.f32.gmra.mrb[0].mxu0 %v805
        %v873 = vpop.f32.mrb[0].mxu0
        %v874 = vadd.f32 0.0, %v873
        %v875 = vpop.f32.mrb[0].mxu0
        %876 = vdwg.mxu0
        %v877 = vadd.f32 %v803, %v874
        %v878 = vxor.u32 %v877, 2147483648
        %v879 = vmul.f32 %v878, 1.442695
        %v880 = vpow.pop %v879
        %v881 = vadd.f32 %v880, 1.0
        %v882 = vrcp.pop %v881
        %v883 = vmul.f32 1.0, %v882
        %v884 = vadd.f32 %v874, %v532
        %886 = vrot.lane.b32.xlu0 %v884, 64
        %v887 = vpop.permute.xlu0 %886
        %v889 = vmul.f32 %v883, %v887
        %891 = vrot.lane.b32.xlu0 %v889, 64
        %v892 = vpop.permute.xlu0 %891
        %v894 = vadd.f32 %v803, %v892
        %v895 = vtanh.pop %v894
        %897 = vrot.lane.b32.xlu0 %v895, 64
        %v898 = vpop.permute.xlu0 %897
        %v900 = vsub.f32 %v801, %v898
        %902 = vrot.lane.b32.xlu0 %v900, 32
        %v903 = vpop.permute.xlu0 %902
        %v905 = vmul.f32 %v883, %v903
        %907 = vrot.lane.b32.xlu0 %v905, 32
        %v908 = vpop.permute.xlu0 %907
        %v910 = vadd.f32 %v895, %v908
        %912 = vrot.lane.b32.xlu0 %v910, 64
        %v913 = vpop.permute.xlu0 %912
        %915 = vst.msk [vmem:[#allocation3] sm:$0xff] %vm336, %v913
        %s916 = scalar_lea.vmem %s311, 24 [#allocation12]
        %917 = vst.msk [vmem:[%s916] sm:$0xff] %vm336, %v913
        %s918 = sand.u32 %s164, 1
        %s919 = scalar_lea.sflag [#allocation6], %s918
        %s920 = sand.u32 %s164, 1
        %s921 = smul.addr %s920, 32
        %s922 = scalar_lea.vmem [#allocation12], %s921
        // Predicated region
        $region65: #{tpu_custom_call.1} parent=43 // pred_check
          %p923 = pneg %p174
        $region66: #{tpu_custom_call.1} parent=43 // pred_check_branch
          %925 = sbr.rel (%p923) target = $region68
        $region67: #{tpu_custom_call.1} parent=43 // pred_region
          %s926 = smul.u32 4, %s25
          %s928 = ssub.s32 512, 512
          %929 = vsyncadd %s919, %s928
          %s930 = smul.addr %s926, 128
          %s931 = scalar_lea.hbm %s6, %s930
          %s932 = sshll.u32 %s922, 4
          %s933 = int_to_ptr.vmem [resolvable:$true] %s932
          %938 = dma.vmem_to_hbm [thread:$0]  %s933, 512, %s931, %s919, 128, 128, 8
        $region68: #{tpu_custom_call.1} parent=43 // pred_fallthru
          _
      $region44: #{tpu_custom_call.1} parent=5 // pred_fallthru
        _
      %p939 = scmp.le.s32.totalorder 2, %s20
      // Predicated region
      $region69: #{tpu_custom_call.1} parent=5 // pred_check
        %p940 = pneg %p939
      $region70: #{tpu_custom_call.1} parent=5 // pred_check_branch
        %942 = sbr.rel (%p940) target = $region72
      $region71: #{tpu_custom_call.1} parent=5 // pred_region
        %s943 = ssub.s32 %s20, 2
        // Predicated region
        $region73: #{tpu_custom_call.1} parent=71 // pred_check
          %p944 = pneg %p180
        $region74: #{tpu_custom_call.1} parent=71 // pred_check_branch
          %946 = sbr.rel (%p944) target = $region76
        $region75: #{tpu_custom_call.1} parent=71 // pred_region
          %s947 = sand.u32 %s165, 1
          %s948 = scalar_lea.sflag [#allocation6], %s947
          %s949 = sand.u32 %s165, 1
          %s950 = smul.addr %s949, 32
          %s951 = scalar_lea.vmem [#allocation12], %s950
          %952 = dma.done %s948, 512
        $region76: #{tpu_custom_call.1} parent=71 // pred_fallthru
          _
      $region72: #{tpu_custom_call.1} parent=5 // pred_fallthru
        _
    $region6: #{tpu_custom_call.1} parent=1 // loop_footer
      %s24 = sadd.s32 1, %s20
    $region7: #{tpu_custom_call.1} parent=1 // loop_footer_branch
      %19 = sbr.rel target = $region3
    $region8: #{tpu_custom_call.1} parent=1 // loop_exit
      _
    %953 = vsyncpa [#allocation5], 1
    %s954 = scalar_lea.sflag [#allocation5], 1
    %955 = vsyncpa %s954, 1
    %956 = vsyncpa [#allocation8], 1
    %957 = vsyncpa [#allocation11], 1
    %958 = vsyncpa [#allocation6], 1
    %s959 = scalar_lea.sflag [#allocation6], 1
    %960 = vsyncpa %s959, 1

</llo_original>
